<compile_context>
chip_gen: v6e
topology: v6e:2x2x1
jax: 0.10.0
libtpu: 0.0.40
codegen_flags: <defaults>
</compile_context>

<pallas_src>
import functools

import jax
import jax.numpy as jnp
from jax import lax
from jax.experimental import pallas as pl
from jax.experimental.pallas import tpu as pltpu


def _round_up(n, m):
    return ((n + m - 1) // m) * m


def _make_mlp_kernel(row_chunk, num_chunks):
    def kernel(x_ref, w1_ref, b1_ref, w2_ref, b2_ref, w3_ref, b3_ref, o_ref):
        # Weights/biases are grid-invariant and fully resident in VMEM.
        w1 = w1_ref[...]        # (D,   H1p) bf16
        b1 = b1_ref[...]        # (1,   H1p) f32
        w2 = w2_ref[...]        # (H1p, H2p) bf16
        b2 = b2_ref[...]        # (1,   H2p) f32
        w3 = w3_ref[...]        # (1,   H2p) f32  (last layer as a row vector)
        b3 = b3_ref[...]        # (1, 1)     f32

        def chunk_body(c, carry):
            r0 = pl.multiple_of(c * row_chunk, row_chunk)
            xc = x_ref[pl.ds(r0, row_chunk), :]                   # (rc, D) bf16

            h1 = jnp.tanh(
                jnp.dot(xc, w1, preferred_element_type=jnp.float32) + b1
            )                                                     # (rc, H1p) f32
            h2 = jnp.tanh(
                jnp.dot(h1.astype(jnp.bfloat16), w2,
                        preferred_element_type=jnp.float32) + b2
            )                                                     # (rc, H2p) f32

            # Final Linear(H2 -> 1): elementwise mul + lane reduce (avoids a
            # degenerate N=1 matmul and a padded 128-lane output slab).
            out = jnp.sum(h2 * w3, axis=1, keepdims=True) + b3    # (rc, 1) f32
            o_ref[pl.ds(r0, row_chunk), :] = out.astype(o_ref.dtype)
            return carry

        if num_chunks == 1:
            chunk_body(0, 0)
        else:
            # fori_loop (not a static Python for) bounds vreg live ranges per
            # chunk when tile_b > row_chunk.
            lax.fori_loop(0, num_chunks, chunk_body, 0)

    return kernel


@functools.partial(jax.jit, static_argnames=("tile_b", "row_chunk"))
def mlp_forward(x, w1, b1, w2, b2, w3, b3, *, tile_b=256, row_chunk=256):
    """Pallas MLP forward. x: (B, D) f32 -> (B, 1) f32."""
    B, D = x.shape
    H1 = w1.shape[1]
    H2 = w2.shape[1]
    H1p = _round_up(H1, 128)
    H2p = _round_up(H2, 128)

    # Effective batch tile / in-kernel chunk (static Python ints under jit).
    tb = min(tile_b, max(8, _round_up(B, 8)))
    rc = min(row_chunk, tb)
    if tb % rc != 0:
        rc = tb
    num_chunks = tb // rc

    # One-time weight prep: bf16 matrices, zero-padded hidden dims (exact:
    # padded pre-activations are 0 -> tanh(0)=0, and padded w3 lanes are 0).
    w1p = jnp.zeros((D, H1p), jnp.bfloat16).at[:, :H1].set(w1.astype(jnp.bfloat16))
    b1p = jnp.zeros((1, H1p), jnp.float32).at[:, :H1].set(b1.reshape(1, H1))
    w2p = jnp.zeros((H1p, H2p), jnp.bfloat16).at[:H1, :H2].set(w2.astype(jnp.bfloat16))
    b2p = jnp.zeros((1, H2p), jnp.float32).at[:, :H2].set(b2.reshape(1, H2))
    w3p = jnp.zeros((1, H2p), jnp.float32).at[:, :H2].set(w3.reshape(1, H2))
    b3p = b3.reshape(1, 1).astype(jnp.float32)

    x_bf16 = x.astype(jnp.bfloat16)   # halves the dominant HBM read

    grid = (pl.cdiv(B, tb),)
    out = pl.pallas_call(
        _make_mlp_kernel(rc, num_chunks),
        out_shape=jax.ShapeDtypeStruct((B, 1), jnp.float32),
        grid_spec=pltpu.PrefetchScalarGridSpec(
            num_scalar_prefetch=0,
            grid=grid,
            in_specs=[
                pl.BlockSpec((tb, D), lambda i: (i, 0)),       # x tile (bf16)
                pl.BlockSpec((D, H1p), lambda i: (0, 0)),      # W1 (resident)
                pl.BlockSpec((1, H1p), lambda i: (0, 0)),      # b1
                pl.BlockSpec((H1p, H2p), lambda i: (0, 0)),    # W2
                pl.BlockSpec((1, H2p), lambda i: (0, 0)),      # b2
                pl.BlockSpec((1, H2p), lambda i: (0, 0)),      # W3 (row vector)
                pl.BlockSpec((1, 1), lambda i: (0, 0)),        # b3
            ],
            out_specs=pl.BlockSpec((tb, 1), lambda i: (i, 0)),  # 4 B/row writeback
        ),
        compiler_params=pltpu.CompilerParams(
            dimension_semantics=("parallel",),   # batch axis -> megacore on v7x
        ),
    )(x_bf16, w1p, b1p, w2p, b2p, w3p, b3p)

    return out  # (B, 1)


def init_params(key, input_size, hidden_layer_size):
    """Deterministic init mirroring nn.Linear's U(-1/sqrt(fan_in), +1/sqrt(fan_in))."""
    sizes = [input_size] + list(hidden_layer_size) + [1]
    params = []
    for i in range(len(sizes) - 1):
        fan_in, fan_out = sizes[i], sizes[i + 1]
        key, kw, kb = jax.random.split(key, 3)
        bound = 1.0 / jnp.sqrt(fan_in)
        w = jax.random.uniform(kw, (fan_in, fan_out), jnp.float32, -bound, bound)
        b = jax.random.uniform(kb, (fan_out,), jnp.float32, -bound, bound)
        params.append((w, b))
    return params


def reference_forward(x, params):
    h = x
    n = len(params)
    for i, (w, b) in enumerate(params):
        h = h @ w + b
        if i < n - 1:
            h = jnp.tanh(h)  # dropout_p = 0.0 -> identity
    return h


if __name__ == "__main__":
    # Small shapes consistent with the module (input 2560, hidden [640, 128]
    # scaled down). H2=64 exercises the hidden-dim zero-padding path.
    INPUT_SIZE = 256
    HIDDEN = [128, 64]

    key = jax.random.PRNGKey(0)
    key, kx = jax.random.split(key)
    params = init_params(key, INPUT_SIZE, HIDDEN)
    (w1, b1), (w2, b2), (w3, b3) = params

    # B=512: 2 full grid steps (both v7x TensorCores busy).
    # B=384: multi-tile with a partial last tile (masked writeback path).
    for BATCH in (512, 384):
        kxb = jax.random.fold_in(kx, BATCH)
        x = jax.random.normal(kxb, (BATCH, INPUT_SIZE), jnp.float32)

        out = mlp_forward(x, w1, b1, w2, b2, w3, b3, tile_b=256)
        out = jax.block_until_ready(out)

        ref = reference_forward(x, params)
        assert out.shape == (BATCH, 1), out.shape
        max_err = float(jnp.max(jnp.abs(out - ref)))
        # bf16 operands (f32 accumulation) vs pure-f32 reference -> loose tol.
        assert max_err < 3e-2, f"B={BATCH}: max err {max_err}"

    print("KERNEL_OK")
</pallas_src>

<mosaic_0001>
module attributes {stable_mosaic.version = 11 : i64} {
  func.func @kernel(%arg0: i32, %arg1: memref<256x256xbf16, #tpu.memory_space<vmem>>, %arg2: memref<256x128xbf16, #tpu.memory_space<vmem>>, %arg3: memref<1x128xf32, #tpu.memory_space<vmem>>, %arg4: memref<128x128xbf16, #tpu.memory_space<vmem>>, %arg5: memref<1x128xf32, #tpu.memory_space<vmem>>, %arg6: memref<1x128xf32, #tpu.memory_space<vmem>>, %arg7: memref<1x1xf32, #tpu.memory_space<vmem>>, %arg8: memref<256x1xf32, #tpu.memory_space<vmem>>) attributes {dimension_semantics = [#tpu.dimension_semantics<parallel>], iteration_bounds = array<i64: 2>, scalar_prefetch = 0 : i64, scratch_operands = 0 : i64, tpu.core_type = #tpu.core_type<tc>, window_params = [{transform_indices = @transform_0, window_bounds = array<i64: 256, 256>}, {pipeline_mode = #tpu.pipeline_mode<synchronous>, transform_indices = @transform_1, window_bounds = array<i64: 256, 128>}, {pipeline_mode = #tpu.pipeline_mode<synchronous>, transform_indices = @transform_2, window_bounds = array<i64: 1, 128>}, {pipeline_mode = #tpu.pipeline_mode<synchronous>, transform_indices = @transform_3, window_bounds = array<i64: 128, 128>}, {pipeline_mode = #tpu.pipeline_mode<synchronous>, transform_indices = @transform_4, window_bounds = array<i64: 1, 128>}, {pipeline_mode = #tpu.pipeline_mode<synchronous>, transform_indices = @transform_5, window_bounds = array<i64: 1, 128>}, {pipeline_mode = #tpu.pipeline_mode<synchronous>, transform_indices = @transform_6, window_bounds = array<i64: 1, 1>}, {transform_indices = @transform_7, window_bounds = array<i64: 256, 1>}]} {
    %c0 = arith.constant 0 : index
    %c0_0 = arith.constant 0 : index
    %0 = vector.load %arg2[%c0, %c0_0] : memref<256x128xbf16, #tpu.memory_space<vmem>>, vector<256x128xbf16>
    %c0_1 = arith.constant 0 : index
    %c0_2 = arith.constant 0 : index
    %1 = vector.load %arg3[%c0_1, %c0_2] : memref<1x128xf32, #tpu.memory_space<vmem>>, vector<1x128xf32>
    %c0_3 = arith.constant 0 : index
    %c0_4 = arith.constant 0 : index
    %2 = vector.load %arg4[%c0_3, %c0_4] : memref<128x128xbf16, #tpu.memory_space<vmem>>, vector<128x128xbf16>
    %c0_5 = arith.constant 0 : index
    %c0_6 = arith.constant 0 : index
    %3 = vector.load %arg5[%c0_5, %c0_6] : memref<1x128xf32, #tpu.memory_space<vmem>>, vector<1x128xf32>
    %c0_7 = arith.constant 0 : index
    %c0_8 = arith.constant 0 : index
    %4 = vector.load %arg6[%c0_7, %c0_8] : memref<1x128xf32, #tpu.memory_space<vmem>>, vector<1x128xf32>
    %c0_9 = arith.constant 0 : index
    %c0_10 = arith.constant 0 : index
    %5 = vector.load %arg7[%c0_9, %c0_10] : memref<1x1xf32, #tpu.memory_space<vmem>>, vector<1x1xf32>
    %c0_i32 = arith.constant 0 : i32
    %6 = tpu.assume_multiple %c0_i32, 256 : i32
    %7 = arith.index_cast %6 : i32 to index
    %c0_11 = arith.constant 0 : index
    %8 = vector.load %arg1[%7, %c0_11] : memref<256x256xbf16, #tpu.memory_space<vmem>>, vector<256x256xbf16>
    %cst = arith.constant dense<0.000000e+00> : vector<256x128xf32>
    %9 = tpu.matmul %8, %0, %cst {dimension_numbers = #tpu.dot_dimension_numbers<[1], [0], [0], [1], [0, 0, 1, 1], [], []>} : vector<256x256xbf16>, vector<256x128xbf16>, vector<256x128xf32> -> vector<256x128xf32>
    %10 = vector.broadcast %1 : vector<1x128xf32> to vector<256x128xf32>
    %11 = arith.addf %9, %10 : vector<256x128xf32>
    %12 = math.tanh %11 : vector<256x128xf32>
    %13 = arith.truncf %12 : vector<256x128xf32> to vector<256x128xbf16>
    %cst_12 = arith.constant dense<0.000000e+00> : vector<256x128xf32>
    %14 = tpu.matmul %13, %2, %cst_12 {dimension_numbers = #tpu.dot_dimension_numbers<[1], [0], [0], [1], [0, 0, 1, 1], [], []>} : vector<256x128xbf16>, vector<128x128xbf16>, vector<256x128xf32> -> vector<256x128xf32>
    %15 = vector.broadcast %3 : vector<1x128xf32> to vector<256x128xf32>
    %16 = arith.addf %14, %15 : vector<256x128xf32>
    %17 = math.tanh %16 : vector<256x128xf32>
    %18 = vector.broadcast %4 : vector<1x128xf32> to vector<256x128xf32>
    %19 = arith.mulf %17, %18 : vector<256x128xf32>
    %cst_13 = arith.constant dense<0.000000e+00> : vector<256xf32>
    %20 = vector.multi_reduction <add>, %19, %cst_13 [1] : vector<256x128xf32> to vector<256xf32>
    %21 = vector.shape_cast %20 : vector<256xf32> to vector<256x1xf32>
    %22 = vector.broadcast %5 : vector<1x1xf32> to vector<256x1xf32>
    %23 = arith.addf %21, %22 : vector<256x1xf32>
    %24 = arith.index_cast %6 : i32 to index
    %c0_14 = arith.constant 0 : index
    %25 = vector.load %arg8[%24, %c0_14] : memref<256x1xf32, #tpu.memory_space<vmem>>, vector<256x1xf32>
    tpu.vector_store %arg8[%24, %c0_14], %23 {strides = array<i32>} : memref<256x1xf32, #tpu.memory_space<vmem>>, vector<256x1xf32>,
    return
  }
  func.func @transform_0(%arg0: i32) -> (i32, i32) {
    %c0_i32 = arith.constant 0 : i32
    %c0_i32_0 = arith.constant 0 : i32
    return %arg0, %c0_i32 : i32, i32
  }
  func.func @transform_1(%arg0: i32) -> (i32, i32) {
    %c0_i32 = arith.constant 0 : i32
    %c0_i32_0 = arith.constant 0 : i32
    %c0_i32_1 = arith.constant 0 : i32
    return %c0_i32, %c0_i32_0 : i32, i32
  }
  func.func @transform_2(%arg0: i32) -> (i32, i32) {
    %c0_i32 = arith.constant 0 : i32
    %c0_i32_0 = arith.constant 0 : i32
    %c0_i32_1 = arith.constant 0 : i32
    return %c0_i32, %c0_i32_0 : i32, i32
  }
  func.func @transform_3(%arg0: i32) -> (i32, i32) {
    %c0_i32 = arith.constant 0 : i32
    %c0_i32_0 = arith.constant 0 : i32
    %c0_i32_1 = arith.constant 0 : i32
    return %c0_i32, %c0_i32_0 : i32, i32
  }
  func.func @transform_4(%arg0: i32) -> (i32, i32) {
    %c0_i32 = arith.constant 0 : i32
    %c0_i32_0 = arith.constant 0 : i32
    %c0_i32_1 = arith.constant 0 : i32
    return %c0_i32, %c0_i32_0 : i32, i32
  }
  func.func @transform_5(%arg0: i32) -> (i32, i32) {
    %c0_i32 = arith.constant 0 : i32
    %c0_i32_0 = arith.constant 0 : i32
    %c0_i32_1 = arith.constant 0 : i32
    return %c0_i32, %c0_i32_0 : i32, i32
  }
  func.func @transform_6(%arg0: i32) -> (i32, i32) {
    %c0_i32 = arith.constant 0 : i32
    %c0_i32_0 = arith.constant 0 : i32
    %c0_i32_1 = arith.constant 0 : i32
    return %c0_i32, %c0_i32_0 : i32, i32
  }
  func.func @transform_7(%arg0: i32) -> (i32, i32) {
    %c0_i32 = arith.constant 0 : i32
    %c0_i32_0 = arith.constant 0 : i32
    return %arg0, %c0_i32 : i32, i32
  }
}

</mosaic_0001>

<llo_original>
// kernel: mlp_forward.1
$region0: #{mlp_forward.1}
  #allocation0 [shape = 'u32[]', space=smem, size = 0x4, offset = 0x4, fixed_abs, tag = 'smem constant byte address 0x4 - core index']
  #allocation1 [shape = 'u32[144,128]{1,0:T(1,128)}', space=vmem, size = 0x12000, scoped, tag = 'internal scratch']
  #allocation2 [shape = 'f32[1,1]{1,0:T(1,128)S(1)}', space=vmem, size = 0x200, scoped, tag = 'scoped memory for mlp_forward.1']
  %s0 = inlined_call_operand.vmem [shape: bf16[512,256], index: 0, kind: input, shape index: {}]
  %s1 = inlined_call_operand.vmem [shape: bf16[256,128], index: 1, kind: input, shape index: {}]
  %s2 = inlined_call_operand.vmem [shape: f32[1,128], index: 2, kind: input, shape index: {}]
  %s3 = inlined_call_operand.vmem [shape: bf16[128,128], index: 3, kind: input, shape index: {}]
  %s4 = inlined_call_operand.vmem [shape: f32[1,128], index: 4, kind: input, shape index: {}]
  %s5 = inlined_call_operand.vmem [shape: f32[1,128], index: 5, kind: input, shape index: {}]
  %s6 = inlined_call_operand.<no memory space> [shape: f32[1,1], index: 6, kind: input, shape index: {}]
  %s7 = inlined_call_operand.vmem [shape: f32[512,1], index: 7, kind: output, shape index: {}]
  %s8 = sld [smem:[#allocation0]]
  $region61: #{mlp_forward.1} parent=0
    _
  %s10 = ssub.s32 1, %s8
  %s11 = scalar_select 0, %s10, %s8
  %v12 = vstv %s6
  %13 = vst [vmem:[#allocation2] sm:$0x1] %v12
  loop: start=0, step=1, limit=4
  $region2: #{mlp_forward.1} parent=0 // loop_pre_header
    _
  $region3: #{mlp_forward.1} parent=0 // loop_header
    %s15 = sphi 0, %s19
    %p16 = scmp.ge.s32.totalorder %s15, 4
    %s25 = sphi 0, %s27
    %s28 = sphi 0, %s25
    %s29 = sphi 0, %s28
    %s45 = sphi 0, %s29
    %s49 = sphi 0, %s49
    %s51 = sphi 0, %s49
    %s52 = sphi 0, %s51
    %s66 = sphi 0, %s52
    %s70 = sphi 0, %s70
    %s72 = sphi 0, %s70
    %s73 = sphi 0, %s72
    %s87 = sphi 0, %s73
    %s91 = sphi 0, %s91
    %s93 = sphi 0, %s91
    %s94 = sphi 0, %s93
    %s108 = sphi 0, %s94
    %s112 = sphi 0, %s112
    %s114 = sphi 0, %s112
    %s115 = sphi 0, %s114
    %s129 = sphi 0, %s115
    %s133 = sphi 0, %s133
    %s135 = sphi 0, %s133
    %s136 = sphi 0, %s135
    %s150 = sphi 0, %s136
    %s154 = sphi 0, %s154
    %s156 = sphi 0, %s154
    %s157 = sphi 0, %s156
    %s171 = sphi 0, %s157
    %s177 = sphi 0, %s179
    %s180 = sphi 0, %s177
    %s181 = sphi 0, %s180
    %s197 = sphi 0, %s181
  $region4: #{mlp_forward.1} parent=0 // loop_header_branch
    %18 = sbr.rel (%p16) target = $region8
  $region5: #{mlp_forward.1} parent=0 // loop_body
    %s20 = ssub.s32 %s15, 1
    %s21 = ssub.s32 %s15, 2
    %s22 = sadd.s32 %s15, 1
    %s23 = ssub.s32 %s15, %s22
    %p24 = scmp.eq.s32.totalorder %s23, 0
    %s26 = sadd.s32 %s25, 1
    %s27 = scalar_select %p24, %s25, %s26
    %p30 = pneg %p24
    %p31 = scmp.eq.s32.totalorder %s15, 1
    %p32 = por %p30, %p31
    %p33 = scmp.ne.s32.totalorder %s25, %s28
    %p34 = scmp.eq.s32.totalorder %s15, 0
    %p35 = por %p33, %p34
    %p36 = scmp.ne.s32.totalorder %s25, %s28
    %p37 = scmp.eq.s32.totalorder %s20, 1
    %p38 = por %p36, %p37
    %p39 = scmp.ne.s32.totalorder %s28, %s29
    %p40 = scmp.eq.s32.totalorder %s20, 0
    %p41 = por %p39, %p40
    %p42 = scmp.ne.s32.totalorder %s28, %s29
    %p43 = scmp.eq.s32.totalorder %s21, 1
    %p44 = por %p42, %p43
    %p46 = scmp.ne.s32.totalorder %s29, %s45
    %p47 = scmp.eq.s32.totalorder %s21, 0
    %p48 = por %p46, %p47
    %s50 = sadd.s32 %s49, 1
    %p53 = scmp.eq.s32.totalorder %s15, 1
    %p54 = scmp.ne.s32.totalorder %s49, %s51
    %p55 = scmp.eq.s32.totalorder %s15, 0
    %p56 = por %p54, %p55
    %p57 = scmp.ne.s32.totalorder %s49, %s51
    %p58 = scmp.eq.s32.totalorder %s20, 1
    %p59 = por %p57, %p58
    %p60 = scmp.ne.s32.totalorder %s51, %s52
    %p61 = scmp.eq.s32.totalorder %s20, 0
    %p62 = por %p60, %p61
    %p63 = scmp.ne.s32.totalorder %s51, %s52
    %p64 = scmp.eq.s32.totalorder %s21, 1
    %p65 = por %p63, %p64
    %p67 = scmp.ne.s32.totalorder %s52, %s66
    %p68 = scmp.eq.s32.totalorder %s21, 0
    %p69 = por %p67, %p68
    %s71 = sadd.s32 %s70, 1
    %p74 = scmp.eq.s32.totalorder %s15, 1
    %p75 = scmp.ne.s32.totalorder %s70, %s72
    %p76 = scmp.eq.s32.totalorder %s15, 0
    %p77 = por %p75, %p76
    %p78 = scmp.ne.s32.totalorder %s70, %s72
    %p79 = scmp.eq.s32.totalorder %s20, 1
    %p80 = por %p78, %p79
    %p81 = scmp.ne.s32.totalorder %s72, %s73
    %p82 = scmp.eq.s32.totalorder %s20, 0
    %p83 = por %p81, %p82
    %p84 = scmp.ne.s32.totalorder %s72, %s73
    %p85 = scmp.eq.s32.totalorder %s21, 1
    %p86 = por %p84, %p85
    %p88 = scmp.ne.s32.totalorder %s73, %s87
    %p89 = scmp.eq.s32.totalorder %s21, 0
    %p90 = por %p88, %p89
    %s92 = sadd.s32 %s91, 1
    %p95 = scmp.eq.s32.totalorder %s15, 1
    %p96 = scmp.ne.s32.totalorder %s91, %s93
    %p97 = scmp.eq.s32.totalorder %s15, 0
    %p98 = por %p96, %p97
    %p99 = scmp.ne.s32.totalorder %s91, %s93
    %p100 = scmp.eq.s32.totalorder %s20, 1
    %p101 = por %p99, %p100
    %p102 = scmp.ne.s32.totalorder %s93, %s94
    %p103 = scmp.eq.s32.totalorder %s20, 0
    %p104 = por %p102, %p103
    %p105 = scmp.ne.s32.totalorder %s93, %s94
    %p106 = scmp.eq.s32.totalorder %s21, 1
    %p107 = por %p105, %p106
    %p109 = scmp.ne.s32.totalorder %s94, %s108
    %p110 = scmp.eq.s32.totalorder %s21, 0
    %p111 = por %p109, %p110
    %s113 = sadd.s32 %s112, 1
    %p116 = scmp.eq.s32.totalorder %s15, 1
    %p117 = scmp.ne.s32.totalorder %s112, %s114
    %p118 = scmp.eq.s32.totalorder %s15, 0
    %p119 = por %p117, %p118
    %p120 = scmp.ne.s32.totalorder %s112, %s114
    %p121 = scmp.eq.s32.totalorder %s20, 1
    %p122 = por %p120, %p121
    %p123 = scmp.ne.s32.totalorder %s114, %s115
    %p124 = scmp.eq.s32.totalorder %s20, 0
    %p125 = por %p123, %p124
    %p126 = scmp.ne.s32.totalorder %s114, %s115
    %p127 = scmp.eq.s32.totalorder %s21, 1
    %p128 = por %p126, %p127
    %p130 = scmp.ne.s32.totalorder %s115, %s129
    %p131 = scmp.eq.s32.totalorder %s21, 0
    %p132 = por %p130, %p131
    %s134 = sadd.s32 %s133, 1
    %p137 = scmp.eq.s32.totalorder %s15, 1
    %p138 = scmp.ne.s32.totalorder %s133, %s135
    %p139 = scmp.eq.s32.totalorder %s15, 0
    %p140 = por %p138, %p139
    %p141 = scmp.ne.s32.totalorder %s133, %s135
    %p142 = scmp.eq.s32.totalorder %s20, 1
    %p143 = por %p141, %p142
    %p144 = scmp.ne.s32.totalorder %s135, %s136
    %p145 = scmp.eq.s32.totalorder %s20, 0
    %p146 = por %p144, %p145
    %p147 = scmp.ne.s32.totalorder %s135, %s136
    %p148 = scmp.eq.s32.totalorder %s21, 1
    %p149 = por %p147, %p148
    %p151 = scmp.ne.s32.totalorder %s136, %s150
    %p152 = scmp.eq.s32.totalorder %s21, 0
    %p153 = por %p151, %p152
    %s155 = sadd.s32 %s154, 1
    %p158 = scmp.eq.s32.totalorder %s15, 1
    %p159 = scmp.ne.s32.totalorder %s154, %s156
    %p160 = scmp.eq.s32.totalorder %s15, 0
    %p161 = por %p159, %p160
    %p162 = scmp.ne.s32.totalorder %s154, %s156
    %p163 = scmp.eq.s32.totalorder %s20, 1
    %p164 = por %p162, %p163
    %p165 = scmp.ne.s32.totalorder %s156, %s157
    %p166 = scmp.eq.s32.totalorder %s20, 0
    %p167 = por %p165, %p166
    %p168 = scmp.ne.s32.totalorder %s156, %s157
    %p169 = scmp.eq.s32.totalorder %s21, 1
    %p170 = por %p168, %p169
    %p172 = scmp.ne.s32.totalorder %s157, %s171
    %p173 = scmp.eq.s32.totalorder %s21, 0
    %p174 = por %p172, %p173
    %s175 = ssub.s32 %s15, %s22
    %p176 = scmp.eq.s32.totalorder %s175, 0
    %s178 = sadd.s32 %s177, 1
    %s179 = scalar_select %p176, %s177, %s178
    %p182 = pneg %p176
    %p183 = scmp.eq.s32.totalorder %s15, 1
    %p184 = por %p182, %p183
    %p185 = scmp.ne.s32.totalorder %s177, %s180
    %p186 = scmp.eq.s32.totalorder %s15, 0
    %p187 = por %p185, %p186
    %p188 = scmp.ne.s32.totalorder %s177, %s180
    %p189 = scmp.eq.s32.totalorder %s20, 1
    %p190 = por %p188, %p189
    %p191 = scmp.ne.s32.totalorder %s180, %s181
    %p192 = scmp.eq.s32.totalorder %s20, 0
    %p193 = por %p191, %p192
    %p194 = scmp.ne.s32.totalorder %s180, %s181
    %p195 = scmp.eq.s32.totalorder %s21, 1
    %p196 = por %p194, %p195
    %p198 = scmp.ne.s32.totalorder %s181, %s197
    %p199 = scmp.eq.s32.totalorder %s21, 0
    %p200 = por %p198, %p199
    %p201 = scmp.le.s32.totalorder 1, %s15
    %p202 = scmp.lt.s32.totalorder %s15, 3
    %p203 = pnand %p201, %p202
    %p204 = pneg %p203
    // Predicated region
    $region9: #{mlp_forward.1} parent=5 // pred_check
      _
    $region10: #{mlp_forward.1} parent=5 // pred_check_branch
      %206 = sbr.rel (%p203) target = $region12
    $region11: #{mlp_forward.1} parent=5 // pred_region
      %s207 = ssub.s32 %s15, 1
      // Predicated region
      $region13: #{mlp_forward.1} parent=11 // pred_check
        %p208 = pneg %p62
      $region14: #{mlp_forward.1} parent=11 // pred_check_branch
        %210 = sbr.rel (%p208) target = $region16
      $region15: #{mlp_forward.1} parent=11 // pred_region
        _
      $region16: #{mlp_forward.1} parent=11 // pred_fallthru
        _
      // Predicated region
      $region17: #{mlp_forward.1} parent=11 // pred_check
        %p211 = pneg %p83
      $region18: #{mlp_forward.1} parent=11 // pred_check_branch
        %213 = sbr.rel (%p211) target = $region20
      $region19: #{mlp_forward.1} parent=11 // pred_region
        _
      $region20: #{mlp_forward.1} parent=11 // pred_fallthru
        _
      // Predicated region
      $region21: #{mlp_forward.1} parent=11 // pred_check
        %p214 = pneg %p104
      $region22: #{mlp_forward.1} parent=11 // pred_check_branch
        %216 = sbr.rel (%p214) target = $region24
      $region23: #{mlp_forward.1} parent=11 // pred_region
        _
      $region24: #{mlp_forward.1} parent=11 // pred_fallthru
        _
      // Predicated region
      $region25: #{mlp_forward.1} parent=11 // pred_check
        %p217 = pneg %p125
      $region26: #{mlp_forward.1} parent=11 // pred_check_branch
        %219 = sbr.rel (%p217) target = $region28
      $region27: #{mlp_forward.1} parent=11 // pred_region
        _
      $region28: #{mlp_forward.1} parent=11 // pred_fallthru
        _
      // Predicated region
      $region29: #{mlp_forward.1} parent=11 // pred_check
        %p220 = pneg %p146
      $region30: #{mlp_forward.1} parent=11 // pred_check_branch
        %222 = sbr.rel (%p220) target = $region32
      $region31: #{mlp_forward.1} parent=11 // pred_region
        _
      $region32: #{mlp_forward.1} parent=11 // pred_fallthru
        _
      // Predicated region
      $region33: #{mlp_forward.1} parent=11 // pred_check
        %p223 = pneg %p167
      $region34: #{mlp_forward.1} parent=11 // pred_check_branch
        %225 = sbr.rel (%p223) target = $region36
      $region35: #{mlp_forward.1} parent=11 // pred_region
        _
      $region36: #{mlp_forward.1} parent=11 // pred_fallthru
        _
    $region12: #{mlp_forward.1} parent=5 // pred_fallthru
      _
    %p226 = scmp.lt.s32.totalorder %s15, 2
    // Predicated region
    $region37: #{mlp_forward.1} parent=5 // pred_check
      %p227 = pneg %p226
    $region38: #{mlp_forward.1} parent=5 // pred_check_branch
      %229 = sbr.rel (%p227) target = $region40
    $region39: #{mlp_forward.1} parent=5 // pred_region
      // Predicated region
      $region41: #{mlp_forward.1} parent=39 // pred_check
        %p230 = pneg %p35
      $region42: #{mlp_forward.1} parent=39 // pred_check_branch
        %232 = sbr.rel (%p230) target = $region44
      $region43: #{mlp_forward.1} parent=39 // pred_region
        %s233 = smul.u32 32, %s15
        %p234 = scmp.lt.s32.totalorder %s233, 63
        %s235 = scalar_select %p234, %s233, 63
        %s236 = smul.addr %s235, 2
        %s237 = smul.addr %s236, 4
        %s238 = scalar_lea.vmem %s0, %s237
        %s239 = smul.u32 32, %s15
      $region44: #{mlp_forward.1} parent=39 // pred_fallthru
        _
    $region40: #{mlp_forward.1} parent=5 // pred_fallthru
      _
    %p240 = scmp.le.s32.totalorder 1, %s15
    %p241 = scmp.lt.s32.totalorder %s15, 3
    %p242 = pnand %p240, %p241
    %p243 = pneg %p242
    // Predicated region
    $region45: #{mlp_forward.1} parent=5 // pred_check
      _
    $region46: #{mlp_forward.1} parent=5 // pred_check_branch
      %245 = sbr.rel (%p242) target = $region48
    $region47: #{mlp_forward.1} parent=5 // pred_region
      %s246 = ssub.s32 %s15, 1
      %s247 = smul.u32 32, %s20
      %p248 = scmp.lt.s32.totalorder %s247, 63
      %s249 = scalar_select %p248, %s247, 63
      %s250 = smul.addr %s249, 2
      %s251 = smul.addr %s250, 4
      %s252 = scalar_lea.vmem %s0, %s251
      %p253 = pneg %p41
      %p254 = pneg %p38
      %p255 = pneg %p62
      %p256 = pneg %p59
      %p257 = pneg %p83
      %p258 = pneg %p80
      %p259 = pneg %p104
      %p260 = pneg %p101
      %p261 = pneg %p125
      %p262 = pneg %p122
      %p263 = pneg %p146
      %p264 = pneg %p143
      %p265 = pneg %p167
      %p266 = pneg %p164
      %p267 = pneg %p193
      %p268 = pneg %p190
      %s269 = smul.u32 32, %s20
      %p270 = scmp.lt.s32.totalorder %s269, 63
      %s271 = scalar_select %p270, %s269, 63
      %s272 = smul.addr %s271, 8
      %s273 = scalar_lea.vmem %s7, %s272
      %s274 = smul.u32 32, %s20
      %p275 = scmp.lt.s32.totalorder %s274, 63
      %s276 = scalar_select %p275, %s274, 63
      %s277 = smul.addr %s276, 2
      %s278 = smul.addr %s277, 4
      %s279 = scalar_lea.vmem %s0, %s278
      %s280 = smul.u32 32, %s20
      %s281 = smul.u32 32, %s20
      %p282 = scmp.lt.s32.totalorder %s281, 63
      %s283 = scalar_select %p282, %s281, 63
      %s284 = smul.addr %s283, 8
      %s285 = scalar_lea.vmem %s7, %s284
      %s286 = smul.u32 32, %s20
      %v288 = vld [vmem:[%s1] sm:$0xf]
      %v289 = vld [vmem:[%s1 + $0x4] sm:$0xf]
      %v290 = vld [vmem:[%s1 + $0x8] sm:$0xf]
      %v291 = vld [vmem:[%s1 + $0xc] sm:$0xf]
      %v292 = vld [vmem:[%s1 + $0x10] sm:$0xf]
      %v293 = vld [vmem:[%s1 + $0x14] sm:$0xf]
      %v294 = vld [vmem:[%s1 + $0x18] sm:$0xf]
      %v295 = vld [vmem:[%s1 + $0x1c] sm:$0xf]
      %v296 = vld [vmem:[%s1 + $0x20] sm:$0xf]
      %v297 = vld [vmem:[%s1 + $0x24] sm:$0xf]
      %v298 = vld [vmem:[%s1 + $0x28] sm:$0xf]
      %v299 = vld [vmem:[%s1 + $0x2c] sm:$0xf]
      %v300 = vld [vmem:[%s1 + $0x30] sm:$0xf]
      %v301 = vld [vmem:[%s1 + $0x34] sm:$0xf]
      %v302 = vld [vmem:[%s1 + $0x38] sm:$0xf]
      %v303 = vld [vmem:[%s1 + $0x3c] sm:$0xf]
      %v304 = vld [vmem:[%s1 + $0x40] sm:$0xf]
      %v305 = vld [vmem:[%s1 + $0x44] sm:$0xf]
      %v306 = vld [vmem:[%s1 + $0x48] sm:$0xf]
      %v307 = vld [vmem:[%s1 + $0x4c] sm:$0xf]
      %v308 = vld [vmem:[%s1 + $0x50] sm:$0xf]
      %v309 = vld [vmem:[%s1 + $0x54] sm:$0xf]
      %v310 = vld [vmem:[%s1 + $0x58] sm:$0xf]
      %v311 = vld [vmem:[%s1 + $0x5c] sm:$0xf]
      %v312 = vld [vmem:[%s1 + $0x60] sm:$0xf]
      %v313 = vld [vmem:[%s1 + $0x64] sm:$0xf]
      %v314 = vld [vmem:[%s1 + $0x68] sm:$0xf]
      %v315 = vld [vmem:[%s1 + $0x6c] sm:$0xf]
      %v316 = vld [vmem:[%s1 + $0x70] sm:$0xf]
      %v317 = vld [vmem:[%s1 + $0x74] sm:$0xf]
      %v318 = vld [vmem:[%s1 + $0x78] sm:$0xf]
      %v319 = vld [vmem:[%s1 + $0x7c] sm:$0xf]
      %v320 = vld [vmem:[%s2] sm:$0x1]
      %v321 = vld [vmem:[%s3] sm:$0xf]
      %v322 = vld [vmem:[%s3 + $0x4] sm:$0xf]
      %v323 = vld [vmem:[%s3 + $0x8] sm:$0xf]
      %v324 = vld [vmem:[%s3 + $0xc] sm:$0xf]
      %v325 = vld [vmem:[%s3 + $0x10] sm:$0xf]
      %v326 = vld [vmem:[%s3 + $0x14] sm:$0xf]
      %v327 = vld [vmem:[%s3 + $0x18] sm:$0xf]
      %v328 = vld [vmem:[%s3 + $0x1c] sm:$0xf]
      %v329 = vld [vmem:[%s3 + $0x20] sm:$0xf]
      %v330 = vld [vmem:[%s3 + $0x24] sm:$0xf]
      %v331 = vld [vmem:[%s3 + $0x28] sm:$0xf]
      %v332 = vld [vmem:[%s3 + $0x2c] sm:$0xf]
      %v333 = vld [vmem:[%s3 + $0x30] sm:$0xf]
      %v334 = vld [vmem:[%s3 + $0x34] sm:$0xf]
      %v335 = vld [vmem:[%s3 + $0x38] sm:$0xf]
      %v336 = vld [vmem:[%s3 + $0x3c] sm:$0xf]
      %v337 = vld [vmem:[%s4] sm:$0x1]
      %v338 = vld [vmem:[%s5] sm:$0x1]
      %v339 = vld [vmem:[#allocation2] sm:$0x1]
      %s340 = smul.u32 0, 2
      %s341 = smul.addr %s340, 4
      %s342 = scalar_lea.vmem %s279, %s341
      %v343 = vld [vmem:[%s342] sm:$0xff]
      %v344 = vld [vmem:[%s342 + $0x8] sm:$0xff]
      %v345 = vld [vmem:[%s342 + $0x10] sm:$0xff]
      %v346 = vld [vmem:[%s342 + $0x18] sm:$0xff]
      %v347 = vld [vmem:[%s342 + $0x20] sm:$0xff]
      %v348 = vld [vmem:[%s342 + $0x28] sm:$0xff]
      %v349 = vld [vmem:[%s342 + $0x30] sm:$0xff]
      %v350 = vld [vmem:[%s342 + $0x38] sm:$0xff]
      %v351 = vld [vmem:[%s342 + $0x40] sm:$0xff]
      %v352 = vld [vmem:[%s342 + $0x48] sm:$0xff]
      %v353 = vld [vmem:[%s342 + $0x50] sm:$0xff]
      %v354 = vld [vmem:[%s342 + $0x58] sm:$0xff]
      %v355 = vld [vmem:[%s342 + $0x60] sm:$0xff]
      %v356 = vld [vmem:[%s342 + $0x68] sm:$0xff]
      %v357 = vld [vmem:[%s342 + $0x70] sm:$0xff]
      %v358 = vld [vmem:[%s342 + $0x78] sm:$0xff]
      %v359 = vld [vmem:[%s342 + $0x80] sm:$0xff]
      %v360 = vld [vmem:[%s342 + $0x88] sm:$0xff]
      %v361 = vld [vmem:[%s342 + $0x90] sm:$0xff]
      %v362 = vld [vmem:[%s342 + $0x98] sm:$0xff]
      %v363 = vld [vmem:[%s342 + $0xa0] sm:$0xff]
      %v364 = vld [vmem:[%s342 + $0xa8] sm:$0xff]
      %v365 = vld [vmem:[%s342 + $0xb0] sm:$0xff]
      %v366 = vld [vmem:[%s342 + $0xb8] sm:$0xff]
      %v367 = vld [vmem:[%s342 + $0xc0] sm:$0xff]
      %v368 = vld [vmem:[%s342 + $0xc8] sm:$0xff]
      %v369 = vld [vmem:[%s342 + $0xd0] sm:$0xff]
      %v370 = vld [vmem:[%s342 + $0xd8] sm:$0xff]
      %v371 = vld [vmem:[%s342 + $0xe0] sm:$0xff]
      %v372 = vld [vmem:[%s342 + $0xe8] sm:$0xff]
      %v373 = vld [vmem:[%s342 + $0xf0] sm:$0xff]
      %v374 = vld [vmem:[%s342 + $0xf8] sm:$0xff]
      %v376 = vlaneseq
      %v377 = vshrl.u32 %v376, 7
      %v378 = vsub.s32 0, %v377
      %v379 = vrot.slane %v320, %v378
      %v413 = vunpack.c.l.b16 %v343
      %v414 = vunpack.c.h.b16 %v343
      %v415 = vunpack.c.l.b16 %v344
      %v416 = vunpack.c.h.b16 %v344
      %v417 = vunpack.c.l.b16 %v345
      %v418 = vunpack.c.h.b16 %v345
      %v419 = vunpack.c.l.b16 %v346
      %v420 = vunpack.c.h.b16 %v346
      %v421 = vunpack.c.l.b16 %v347
      %v422 = vunpack.c.h.b16 %v347
      %v423 = vunpack.c.l.b16 %v348
      %v424 = vunpack.c.h.b16 %v348
      %v425 = vunpack.c.l.b16 %v349
      %v426 = vunpack.c.h.b16 %v349
      %v427 = vunpack.c.l.b16 %v350
      %v428 = vunpack.c.h.b16 %v350
      %v429 = vunpack.c.l.b16 %v351
      %v430 = vunpack.c.h.b16 %v351
      %v431 = vunpack.c.l.b16 %v352
      %v432 = vunpack.c.h.b16 %v352
      %v433 = vunpack.c.l.b16 %v353
      %v434 = vunpack.c.h.b16 %v353
      %v435 = vunpack.c.l.b16 %v354
      %v436 = vunpack.c.h.b16 %v354
      %v437 = vunpack.c.l.b16 %v355
      %v438 = vunpack.c.h.b16 %v355
      %v439 = vunpack.c.l.b16 %v356
      %v440 = vunpack.c.h.b16 %v356
      %v441 = vunpack.c.l.b16 %v357
      %v442 = vunpack.c.h.b16 %v357
      %v443 = vunpack.c.l.b16 %v358
      %v444 = vunpack.c.h.b16 %v358
      %v445 = vunpack.c.l.b16 %v359
      %v446 = vunpack.c.h.b16 %v359
      %v447 = vunpack.c.l.b16 %v360
      %v448 = vunpack.c.h.b16 %v360
      %v449 = vunpack.c.l.b16 %v361
      %v450 = vunpack.c.h.b16 %v361
      %v451 = vunpack.c.l.b16 %v362
      %v452 = vunpack.c.h.b16 %v362
      %v453 = vunpack.c.l.b16 %v363
      %v454 = vunpack.c.h.b16 %v363
      %v455 = vunpack.c.l.b16 %v364
      %v456 = vunpack.c.h.b16 %v364
      %v457 = vunpack.c.l.b16 %v365
      %v458 = vunpack.c.h.b16 %v365
      %v459 = vunpack.c.l.b16 %v366
      %v460 = vunpack.c.h.b16 %v366
      %v461 = vunpack.c.l.b16 %v367
      %v462 = vunpack.c.h.b16 %v367
      %v463 = vunpack.c.l.b16 %v368
      %v464 = vunpack.c.h.b16 %v368
      %v465 = vunpack.c.l.b16 %v369
      %v466 = vunpack.c.h.b16 %v369
      %v467 = vunpack.c.l.b16 %v370
      %v468 = vunpack.c.h.b16 %v370
      %v469 = vunpack.c.l.b16 %v371
      %v470 = vunpack.c.h.b16 %v371
      %v471 = vunpack.c.l.b16 %v372
      %v472 = vunpack.c.h.b16 %v372
      %v473 = vunpack.c.l.b16 %v373
      %v474 = vunpack.c.h.b16 %v373
      %v475 = vunpack.c.l.b16 %v374
      %v476 = vunpack.c.h.b16 %v374
      %v477 = vpack.c.b16 %v415, %v413
      %v478 = vpack.c.b16 %v416, %v414
      %v479 = vpack.c.b16 %v419, %v417
      %v480 = vpack.c.b16 %v420, %v418
      %v481 = vpack.c.b16 %v423, %v421
      %v482 = vpack.c.b16 %v424, %v422
      %v483 = vpack.c.b16 %v427, %v425
      %v484 = vpack.c.b16 %v428, %v426
      %v485 = vpack.c.b16 %v431, %v429
      %v486 = vpack.c.b16 %v432, %v430
      %v487 = vpack.c.b16 %v435, %v433
      %v488 = vpack.c.b16 %v436, %v434
      %v489 = vpack.c.b16 %v439, %v437
      %v490 = vpack.c.b16 %v440, %v438
      %v491 = vpack.c.b16 %v443, %v441
      %v492 = vpack.c.b16 %v444, %v442
      %v493 = vpack.c.b16 %v447, %v445
      %v494 = vpack.c.b16 %v448, %v446
      %v495 = vpack.c.b16 %v451, %v449
      %v496 = vpack.c.b16 %v452, %v450
      %v497 = vpack.c.b16 %v455, %v453
      %v498 = vpack.c.b16 %v456, %v454
      %v499 = vpack.c.b16 %v459, %v457
      %v500 = vpack.c.b16 %v460, %v458
      %v501 = vpack.c.b16 %v463, %v461
      %v502 = vpack.c.b16 %v464, %v462
      %v503 = vpack.c.b16 %v467, %v465
      %v504 = vpack.c.b16 %v468, %v466
      %v505 = vpack.c.b16 %v471, %v469
      %v506 = vpack.c.b16 %v472, %v470
      %v507 = vpack.c.b16 %v475, %v473
      %v508 = vpack.c.b16 %v476, %v474
      %v573 = vunpack.c.l.b16 %v288
      %v574 = vunpack.c.l.b16 %v289
      %v575 = vunpack.c.l.b16 %v290
      %v576 = vunpack.c.l.b16 %v291
      %v577 = vunpack.c.l.b16 %v292
      %v578 = vunpack.c.l.b16 %v293
      %v579 = vunpack.c.l.b16 %v294
      %v580 = vunpack.c.l.b16 %v295
      %v581 = vunpack.c.l.b16 %v296
      %v582 = vunpack.c.l.b16 %v297
      %v583 = vunpack.c.l.b16 %v298
      %v584 = vunpack.c.l.b16 %v299
      %v585 = vunpack.c.l.b16 %v300
      %v586 = vunpack.c.l.b16 %v301
      %v587 = vunpack.c.l.b16 %v302
      %v588 = vunpack.c.l.b16 %v303
      %v589 = vunpack.c.l.b16 %v304
      %v590 = vunpack.c.l.b16 %v305
      %v591 = vunpack.c.l.b16 %v306
      %v592 = vunpack.c.l.b16 %v307
      %v593 = vunpack.c.l.b16 %v308
      %v594 = vunpack.c.l.b16 %v309
      %v595 = vunpack.c.l.b16 %v310
      %v596 = vunpack.c.l.b16 %v311
      %v597 = vunpack.c.l.b16 %v312
      %v598 = vunpack.c.l.b16 %v313
      %v599 = vunpack.c.l.b16 %v314
      %v600 = vunpack.c.l.b16 %v315
      %v601 = vunpack.c.l.b16 %v316
      %v602 = vunpack.c.l.b16 %v317
      %v603 = vunpack.c.l.b16 %v318
      %v604 = vunpack.c.l.b16 %v319
      %v605 = vpack.c.b16 %v574, %v573
      %v606 = vpack.c.b16 %v576, %v575
      %v607 = vpack.c.b16 %v578, %v577
      %v608 = vpack.c.b16 %v580, %v579
      %v609 = vpack.c.b16 %v582, %v581
      %v610 = vpack.c.b16 %v584, %v583
      %v611 = vpack.c.b16 %v586, %v585
      %v612 = vpack.c.b16 %v588, %v587
      %v613 = vpack.c.b16 %v590, %v589
      %v614 = vpack.c.b16 %v592, %v591
      %v615 = vpack.c.b16 %v594, %v593
      %v616 = vpack.c.b16 %v596, %v595
      %v617 = vpack.c.b16 %v598, %v597
      %v618 = vpack.c.b16 %v600, %v599
      %v619 = vpack.c.b16 %v602, %v601
      %v620 = vpack.c.b16 %v604, %v603
      %637 = vmatprep.subr.bf16.mxu0 0
      %638 = vmatpush1.bf16.msra.mxu0 %v612
      %639 = vmatprep.subr.bf16.mxu0 0
      %640 = vmatpush1.bf16.msra.mxu0 %v611
      %641 = vmatprep.subr.bf16.mxu0 0
      %642 = vmatpush1.bf16.msra.mxu0 %v610
      %643 = vmatprep.subr.bf16.mxu0 0
      %644 = vmatpush1.bf16.msra.mxu0 %v609
      %645 = vmatprep.subr.bf16.mxu0 0
      %646 = vmatpush1.bf16.msra.mxu0 %v608
      %647 = vmatprep.subr.bf16.mxu0 0
      %648 = vmatpush1.bf16.msra.mxu0 %v607
      %649 = vmatprep.subr.bf16.mxu0 0
      %650 = vmatpush1.bf16.msra.mxu0 %v606
      %651 = vmatprep.subr.bf16.mxu0 0
      %652 = vmatpush1.bf16.msra.mxu0 %v605
      %653 = vmatprep.subr.bf16.mxu0 0
      %654 = vmatpush2.bf16.msra.mxu0 %v620
      %655 = vmatprep.subr.bf16.mxu0 0
      %656 = vmatpush2.bf16.msra.mxu0 %v619
      %657 = vmatprep.subr.bf16.mxu0 0
      %658 = vmatpush2.bf16.msra.mxu0 %v618
      %659 = vmatprep.subr.bf16.mxu0 0
      %660 = vmatpush2.bf16.msra.mxu0 %v617
      %661 = vmatprep.subr.bf16.mxu0 0
      %662 = vmatpush2.bf16.msra.mxu0 %v616
      %663 = vmatprep.subr.bf16.mxu0 0
      %664 = vmatpush2.bf16.msra.mxu0 %v615
      %665 = vmatprep.subr.bf16.mxu0 0
      %666 = vmatpush2.bf16.msra.mxu0 %v614
      %667 = vmatprep.subr.bf16.mxu0 0
      %668 = vmatpush2.bf16.msra.mxu0 %v613
      %669 = vmatprep.mubr.bf16.mxu0 %v478
      %670 = vmatmul.mubr.bf16.gmra.mxu0 %v477
      %v671 = vpop.f32.mrf.mxu0
      %v672 = vadd.f32 %v379, %v671
      %v673 = vpop.f32.mrf.mxu0
      %v674 = vpop.f32.mrf.mxu0
      %v675 = vadd.f32 %v379, %v674
      %v676 = vpop.f32.mrf.mxu0
      %677 = vmatprep.mubr.bf16.mxu0 %v480
      %678 = vmatmul.mubr.bf16.gmra.mxu0 %v479
      %v679 = vpop.f32.mrf.mxu0
      %v680 = vadd.f32 %v379, %v679
      %v681 = vpop.f32.mrf.mxu0
      %v682 = vpop.f32.mrf.mxu0
      %v683 = vadd.f32 %v379, %v682
      %v684 = vpop.f32.mrf.mxu0
      %685 = vmatprep.mubr.bf16.mxu0 %v482
      %686 = vmatmul.mubr.bf16.gmra.mxu0 %v481
      %v687 = vpop.f32.mrf.mxu0
      %v688 = vadd.f32 %v379, %v687
      %v689 = vpop.f32.mrf.mxu0
      %v690 = vpop.f32.mrf.mxu0
      %v691 = vadd.f32 %v379, %v690
      %v692 = vpop.f32.mrf.mxu0
      %693 = vmatprep.mubr.bf16.mxu0 %v484
      %694 = vmatmul.mubr.bf16.gmra.mxu0 %v483
      %v695 = vpop.f32.mrf.mxu0
      %v696 = vadd.f32 %v379, %v695
      %v697 = vpop.f32.mrf.mxu0
      %v698 = vpop.f32.mrf.mxu0
      %v699 = vadd.f32 %v379, %v698
      %v700 = vpop.f32.mrf.mxu0
      %701 = vmatprep.mubr.bf16.mxu0 %v486
      %702 = vmatmul.mubr.bf16.gmra.mxu0 %v485
      %v703 = vpop.f32.mrf.mxu0
      %v704 = vadd.f32 %v379, %v703
      %v705 = vpop.f32.mrf.mxu0
      %v706 = vpop.f32.mrf.mxu0
      %v707 = vadd.f32 %v379, %v706
      %v708 = vpop.f32.mrf.mxu0
      %709 = vmatprep.mubr.bf16.mxu0 %v488
      %710 = vmatmul.mubr.bf16.gmra.mxu0 %v487
      %v711 = vpop.f32.mrf.mxu0
      %v712 = vadd.f32 %v379, %v711
      %v713 = vpop.f32.mrf.mxu0
      %v714 = vpop.f32.mrf.mxu0
      %v715 = vadd.f32 %v379, %v714
      %v716 = vpop.f32.mrf.mxu0
      %717 = vmatprep.mubr.bf16.mxu0 %v490
      %718 = vmatmul.mubr.bf16.gmra.mxu0 %v489
      %v719 = vpop.f32.mrf.mxu0
      %v720 = vadd.f32 %v379, %v719
      %v721 = vpop.f32.mrf.mxu0
      %v722 = vpop.f32.mrf.mxu0
      %v723 = vadd.f32 %v379, %v722
      %v724 = vpop.f32.mrf.mxu0
      %725 = vmatprep.mubr.bf16.mxu0 %v492
      %726 = vmatmul.mubr.bf16.gmra.mxu0 %v491
      %v727 = vpop.f32.mrf.mxu0
      %v728 = vadd.f32 %v379, %v727
      %v729 = vpop.f32.mrf.mxu0
      %v730 = vpop.f32.mrf.mxu0
      %v731 = vadd.f32 %v379, %v730
      %v732 = vpop.f32.mrf.mxu0
      %733 = vmatprep.mubr.bf16.mxu0 %v494
      %734 = vmatmul.mubr.bf16.gmra.mxu0 %v493
      %v735 = vpop.f32.mrf.mxu0
      %v736 = vadd.f32 %v379, %v735
      %v737 = vpop.f32.mrf.mxu0
      %v738 = vpop.f32.mrf.mxu0
      %v739 = vadd.f32 %v379, %v738
      %v740 = vpop.f32.mrf.mxu0
      %741 = vmatprep.mubr.bf16.mxu0 %v496
      %742 = vmatmul.mubr.bf16.gmra.mxu0 %v495
      %v743 = vpop.f32.mrf.mxu0
      %v744 = vadd.f32 %v379, %v743
      %v745 = vpop.f32.mrf.mxu0
      %v746 = vpop.f32.mrf.mxu0
      %v747 = vadd.f32 %v379, %v746
      %v748 = vpop.f32.mrf.mxu0
      %749 = vmatprep.mubr.bf16.mxu0 %v498
      %750 = vmatmul.mubr.bf16.gmra.mxu0 %v497
      %v751 = vpop.f32.mrf.mxu0
      %v752 = vadd.f32 %v379, %v751
      %v753 = vpop.f32.mrf.mxu0
      %v754 = vpop.f32.mrf.mxu0
      %v755 = vadd.f32 %v379, %v754
      %v756 = vpop.f32.mrf.mxu0
      %757 = vmatprep.mubr.bf16.mxu0 %v500
      %758 = vmatmul.mubr.bf16.gmra.mxu0 %v499
      %v759 = vpop.f32.mrf.mxu0
      %v760 = vadd.f32 %v379, %v759
      %v761 = vpop.f32.mrf.mxu0
      %v762 = vpop.f32.mrf.mxu0
      %v763 = vadd.f32 %v379, %v762
      %v764 = vpop.f32.mrf.mxu0
      %765 = vmatprep.mubr.bf16.mxu0 %v502
      %766 = vmatmul.mubr.bf16.gmra.mxu0 %v501
      %v767 = vpop.f32.mrf.mxu0
      %v768 = vadd.f32 %v379, %v767
      %v769 = vpop.f32.mrf.mxu0
      %v770 = vpop.f32.mrf.mxu0
      %v771 = vadd.f32 %v379, %v770
      %v772 = vpop.f32.mrf.mxu0
      %773 = vmatprep.mubr.bf16.mxu0 %v504
      %774 = vmatmul.mubr.bf16.gmra.mxu0 %v503
      %v775 = vpop.f32.mrf.mxu0
      %v776 = vadd.f32 %v379, %v775
      %v777 = vpop.f32.mrf.mxu0
      %v778 = vpop.f32.mrf.mxu0
      %v779 = vadd.f32 %v379, %v778
      %v780 = vpop.f32.mrf.mxu0
      %781 = vmatprep.mubr.bf16.mxu0 %v506
      %782 = vmatmul.mubr.bf16.gmra.mxu0 %v505
      %v783 = vpop.f32.mrf.mxu0
      %v784 = vadd.f32 %v379, %v783
      %v785 = vpop.f32.mrf.mxu0
      %v786 = vpop.f32.mrf.mxu0
      %v787 = vadd.f32 %v379, %v786
      %v788 = vpop.f32.mrf.mxu0
      %789 = vmatprep.mubr.bf16.mxu0 %v508
      %790 = vmatmul.mubr.bf16.gmra.mxu0 %v507
      %v791 = vpop.f32.mrf.mxu0
      %v792 = vadd.f32 %v379, %v791
      %v793 = vpop.f32.mrf.mxu0
      %v794 = vpop.f32.mrf.mxu0
      %v795 = vadd.f32 %v379, %v794
      %v796 = vpop.f32.mrf.mxu0
      %797 = vdwg.mxu0
      %v798 = vtanh.pop %v672
      %v799 = vtanh.pop %v675
      %v800 = vtanh.pop %v680
      %v801 = vtanh.pop %v683
      %v802 = vtanh.pop %v688
      %v803 = vtanh.pop %v691
      %v804 = vtanh.pop %v696
      %v805 = vtanh.pop %v699
      %v806 = vtanh.pop %v704
      %v807 = vtanh.pop %v707
      %v808 = vtanh.pop %v712
      %v809 = vtanh.pop %v715
      %v810 = vtanh.pop %v720
      %v811 = vtanh.pop %v723
      %v812 = vtanh.pop %v728
      %v813 = vtanh.pop %v731
      %v814 = vtanh.pop %v736
      %v815 = vtanh.pop %v739
      %v816 = vtanh.pop %v744
      %v817 = vtanh.pop %v747
      %v818 = vtanh.pop %v752
      %v819 = vtanh.pop %v755
      %v820 = vtanh.pop %v760
      %v821 = vtanh.pop %v763
      %v822 = vtanh.pop %v768
      %v823 = vtanh.pop %v771
      %v824 = vtanh.pop %v776
      %v825 = vtanh.pop %v779
      %v826 = vtanh.pop %v784
      %v827 = vtanh.pop %v787
      %v828 = vtanh.pop %v792
      %v829 = vtanh.pop %v795
      %v830 = vpack.c.bf16 %v799, %v798
      %v831 = vpack.c.bf16 %v801, %v800
      %v832 = vpack.c.bf16 %v803, %v802
      %v833 = vpack.c.bf16 %v805, %v804
      %v834 = vpack.c.bf16 %v807, %v806
      %v835 = vpack.c.bf16 %v809, %v808
      %v836 = vpack.c.bf16 %v811, %v810
      %v837 = vpack.c.bf16 %v813, %v812
      %v838 = vpack.c.bf16 %v815, %v814
      %v839 = vpack.c.bf16 %v817, %v816
      %v840 = vpack.c.bf16 %v819, %v818
      %v841 = vpack.c.bf16 %v821, %v820
      %v842 = vpack.c.bf16 %v823, %v822
      %v843 = vpack.c.bf16 %v825, %v824
      %v844 = vpack.c.bf16 %v827, %v826
      %v845 = vpack.c.bf16 %v829, %v828
      %v847 = vlaneseq
      %v848 = vshrl.u32 %v847, 7
      %v849 = vsub.s32 0, %v848
      %v850 = vrot.slane %v337, %v849
      %v868 = vunpack.c.l.b16 %v321
      %v869 = vunpack.c.l.b16 %v322
      %v870 = vunpack.c.l.b16 %v323
      %v871 = vunpack.c.l.b16 %v324
      %v872 = vunpack.c.l.b16 %v325
      %v873 = vunpack.c.l.b16 %v326
      %v874 = vunpack.c.l.b16 %v327
      %v875 = vunpack.c.l.b16 %v328
      %v876 = vunpack.c.l.b16 %v329
      %v877 = vunpack.c.l.b16 %v330
      %v878 = vunpack.c.l.b16 %v331
      %v879 = vunpack.c.l.b16 %v332
      %v880 = vunpack.c.l.b16 %v333
      %v881 = vunpack.c.l.b16 %v334
      %v882 = vunpack.c.l.b16 %v335
      %v883 = vunpack.c.l.b16 %v336
      %v884 = vpack.c.b16 %v869, %v868
      %v885 = vpack.c.b16 %v871, %v870
      %v886 = vpack.c.b16 %v873, %v872
      %v887 = vpack.c.b16 %v875, %v874
      %v888 = vpack.c.b16 %v877, %v876
      %v889 = vpack.c.b16 %v879, %v878
      %v890 = vpack.c.b16 %v881, %v880
      %v891 = vpack.c.b16 %v883, %v882
      %900 = vmatprep.subr.bf16.mxu0 0
      %901 = vmatpush1.bf16.msra.mxu0 %v891
      %902 = vmatprep.subr.bf16.mxu0 0
      %903 = vmatpush1.bf16.msra.mxu0 %v890
      %904 = vmatprep.subr.bf16.mxu0 0
      %905 = vmatpush1.bf16.msra.mxu0 %v889
      %906 = vmatprep.subr.bf16.mxu0 0
      %907 = vmatpush1.bf16.msra.mxu0 %v888
      %908 = vmatprep.subr.bf16.mxu0 0
      %909 = vmatpush1.bf16.msra.mxu0 %v887
      %910 = vmatprep.subr.bf16.mxu0 0
      %911 = vmatpush1.bf16.msra.mxu0 %v886
      %912 = vmatprep.subr.bf16.mxu0 0
      %913 = vmatpush1.bf16.msra.mxu0 %v885
      %914 = vmatprep.subr.bf16.mxu0 0
      %915 = vmatpush1.bf16.msra.mxu0 %v884
      %916 = vmatprep.subr.bf16.mxu0 0
      %917 = vmatpush2.bf16.msra.mxu0 0
      %918 = vmatprep.subr.bf16.mxu0 0
      %919 = vmatpush2.bf16.msra.mxu0 0
      %920 = vmatprep.subr.bf16.mxu0 0
      %921 = vmatpush2.bf16.msra.mxu0 0
      %922 = vmatprep.subr.bf16.mxu0 0
      %923 = vmatpush2.bf16.msra.mxu0 0
      %924 = vmatprep.subr.bf16.mxu0 0
      %925 = vmatpush2.bf16.msra.mxu0 0
      %926 = vmatprep.subr.bf16.mxu0 0
      %927 = vmatpush2.bf16.msra.mxu0 0
      %928 = vmatprep.subr.bf16.mxu0 0
      %929 = vmatpush2.bf16.msra.mxu0 0
      %930 = vmatprep.subr.bf16.mxu0 0
      %931 = vmatpush2.bf16.msra.mxu0 0
      %932 = vmatprep.mubr.bf16.mxu0 0
      %933 = vmatmul.mubr.bf16.gmra.mxu0 %v830
      %v934 = vpop.f32.mrf.mxu0
      %v935 = vadd.f32 %v850, %v934
      %v936 = vpop.f32.mrf.mxu0
      %v937 = vpop.f32.mrf.mxu0
      %v938 = vadd.f32 %v850, %v937
      %v939 = vpop.f32.mrf.mxu0
      %940 = vmatprep.mubr.bf16.mxu0 0
      %941 = vmatmul.mubr.bf16.gmra.mxu0 %v831
      %v942 = vpop.f32.mrf.mxu0
      %v943 = vadd.f32 %v850, %v942
      %v944 = vpop.f32.mrf.mxu0
      %v945 = vpop.f32.mrf.mxu0
      %v946 = vadd.f32 %v850, %v945
      %v947 = vpop.f32.mrf.mxu0
      %948 = vmatprep.mubr.bf16.mxu0 0
      %949 = vmatmul.mubr.bf16.gmra.mxu0 %v832
      %v950 = vpop.f32.mrf.mxu0
      %v951 = vadd.f32 %v850, %v950
      %v952 = vpop.f32.mrf.mxu0
      %v953 = vpop.f32.mrf.mxu0
      %v954 = vadd.f32 %v850, %v953
      %v955 = vpop.f32.mrf.mxu0
      %956 = vmatprep.mubr.bf16.mxu0 0
      %957 = vmatmul.mubr.bf16.gmra.mxu0 %v833
      %v958 = vpop.f32.mrf.mxu0
      %v959 = vadd.f32 %v850, %v958
      %v960 = vpop.f32.mrf.mxu0
      %v961 = vpop.f32.mrf.mxu0
      %v962 = vadd.f32 %v850, %v961
      %v963 = vpop.f32.mrf.mxu0
      %964 = vmatprep.mubr.bf16.mxu0 0
      %965 = vmatmul.mubr.bf16.gmra.mxu0 %v834
      %v966 = vpop.f32.mrf.mxu0
      %v967 = vadd.f32 %v850, %v966
      %v968 = vpop.f32.mrf.mxu0
      %v969 = vpop.f32.mrf.mxu0
      %v970 = vadd.f32 %v850, %v969
      %v971 = vpop.f32.mrf.mxu0
      %972 = vmatprep.mubr.bf16.mxu0 0
      %973 = vmatmul.mubr.bf16.gmra.mxu0 %v835
      %v974 = vpop.f32.mrf.mxu0
      %v975 = vadd.f32 %v850, %v974
      %v976 = vpop.f32.mrf.mxu0
      %v977 = vpop.f32.mrf.mxu0
      %v978 = vadd.f32 %v850, %v977
      %v979 = vpop.f32.mrf.mxu0
      %980 = vmatprep.mubr.bf16.mxu0 0
      %981 = vmatmul.mubr.bf16.gmra.mxu0 %v836
      %v982 = vpop.f32.mrf.mxu0
      %v983 = vadd.f32 %v850, %v982
      %v984 = vpop.f32.mrf.mxu0
      %v985 = vpop.f32.mrf.mxu0
      %v986 = vadd.f32 %v850, %v985
      %v987 = vpop.f32.mrf.mxu0
      %988 = vmatprep.mubr.bf16.mxu0 0
      %989 = vmatmul.mubr.bf16.gmra.mxu0 %v837
      %v990 = vpop.f32.mrf.mxu0
      %v991 = vadd.f32 %v850, %v990
      %v992 = vpop.f32.mrf.mxu0
      %v993 = vpop.f32.mrf.mxu0
      %v994 = vadd.f32 %v850, %v993
      %v995 = vpop.f32.mrf.mxu0
      %996 = vmatprep.mubr.bf16.mxu0 0
      %997 = vmatmul.mubr.bf16.gmra.mxu0 %v838
      %v998 = vpop.f32.mrf.mxu0
      %v999 = vadd.f32 %v850, %v998
      %v1000 = vpop.f32.mrf.mxu0
      %v1001 = vpop.f32.mrf.mxu0
      %v1002 = vadd.f32 %v850, %v1001
      %v1003 = vpop.f32.mrf.mxu0
      %1004 = vmatprep.mubr.bf16.mxu0 0
      %1005 = vmatmul.mubr.bf16.gmra.mxu0 %v839
      %v1006 = vpop.f32.mrf.mxu0
      %v1007 = vadd.f32 %v850, %v1006
      %v1008 = vpop.f32.mrf.mxu0
      %v1009 = vpop.f32.mrf.mxu0
      %v1010 = vadd.f32 %v850, %v1009
      %v1011 = vpop.f32.mrf.mxu0
      %1012 = vmatprep.mubr.bf16.mxu0 0
      %1013 = vmatmul.mubr.bf16.gmra.mxu0 %v840
      %v1014 = vpop.f32.mrf.mxu0
      %v1015 = vadd.f32 %v850, %v1014
      %v1016 = vpop.f32.mrf.mxu0
      %v1017 = vpop.f32.mrf.mxu0
      %v1018 = vadd.f32 %v850, %v1017
      %v1019 = vpop.f32.mrf.mxu0
      %1020 = vmatprep.mubr.bf16.mxu0 0
      %1021 = vmatmul.mubr.bf16.gmra.mxu0 %v841
      %v1022 = vpop.f32.mrf.mxu0
      %v1023 = vadd.f32 %v850, %v1022
      %v1024 = vpop.f32.mrf.mxu0
      %v1025 = vpop.f32.mrf.mxu0
      %v1026 = vadd.f32 %v850, %v1025
      %v1027 = vpop.f32.mrf.mxu0
      %1028 = vmatprep.mubr.bf16.mxu0 0
      %1029 = vmatmul.mubr.bf16.gmra.mxu0 %v842
      %v1030 = vpop.f32.mrf.mxu0
      %v1031 = vadd.f32 %v850, %v1030
      %v1032 = vpop.f32.mrf.mxu0
      %v1033 = vpop.f32.mrf.mxu0
      %v1034 = vadd.f32 %v850, %v1033
      %v1035 = vpop.f32.mrf.mxu0
      %1036 = vmatprep.mubr.bf16.mxu0 0
      %1037 = vmatmul.mubr.bf16.gmra.mxu0 %v843
      %v1038 = vpop.f32.mrf.mxu0
      %v1039 = vadd.f32 %v850, %v1038
      %v1040 = vpop.f32.mrf.mxu0
      %v1041 = vpop.f32.mrf.mxu0
      %v1042 = vadd.f32 %v850, %v1041
      %v1043 = vpop.f32.mrf.mxu0
      %1044 = vmatprep.mubr.bf16.mxu0 0
      %1045 = vmatmul.mubr.bf16.gmra.mxu0 %v844
      %v1046 = vpop.f32.mrf.mxu0
      %v1047 = vadd.f32 %v850, %v1046
      %v1048 = vpop.f32.mrf.mxu0
      %v1049 = vpop.f32.mrf.mxu0
      %v1050 = vadd.f32 %v850, %v1049
      %v1051 = vpop.f32.mrf.mxu0
      %1052 = vmatprep.mubr.bf16.mxu0 0
      %1053 = vmatmul.mubr.bf16.gmra.mxu0 %v845
      %v1054 = vpop.f32.mrf.mxu0
      %v1055 = vadd.f32 %v850, %v1054
      %v1056 = vpop.f32.mrf.mxu0
      %v1057 = vpop.f32.mrf.mxu0
      %v1058 = vadd.f32 %v850, %v1057
      %v1059 = vpop.f32.mrf.mxu0
      %1060 = vdwg.mxu0
      %v1061 = vtanh.pop %v935
      %v1062 = vtanh.pop %v938
      %v1063 = vtanh.pop %v943
      %v1064 = vtanh.pop %v946
      %v1065 = vtanh.pop %v951
      %v1066 = vtanh.pop %v954
      %v1067 = vtanh.pop %v959
      %v1068 = vtanh.pop %v962
      %v1069 = vtanh.pop %v967
      %v1070 = vtanh.pop %v970
      %v1071 = vtanh.pop %v975
      %v1072 = vtanh.pop %v978
      %v1073 = vtanh.pop %v983
      %v1074 = vtanh.pop %v986
      %v1075 = vtanh.pop %v991
      %v1076 = vtanh.pop %v994
      %v1077 = vtanh.pop %v999
      %v1078 = vtanh.pop %v1002
      %v1079 = vtanh.pop %v1007
      %v1080 = vtanh.pop %v1010
      %v1081 = vtanh.pop %v1015
      %v1082 = vtanh.pop %v1018
      %v1083 = vtanh.pop %v1023
      %v1084 = vtanh.pop %v1026
      %v1085 = vtanh.pop %v1031
      %v1086 = vtanh.pop %v1034
      %v1087 = vtanh.pop %v1039
      %v1088 = vtanh.pop %v1042
      %v1089 = vtanh.pop %v1047
      %v1090 = vtanh.pop %v1050
      %v1091 = vtanh.pop %v1055
      %v1092 = vtanh.pop %v1058
      %v1094 = vlaneseq
      %v1095 = vshrl.u32 %v1094, 7
      %v1096 = vsub.s32 0, %v1095
      %v1097 = vrot.slane %v338, %v1096
      %v1099 = vmul.f32 %v1061, %v1097
      %v1100 = vmul.f32 %v1062, %v1097
      %v1101 = vmul.f32 %v1063, %v1097
      %v1102 = vmul.f32 %v1064, %v1097
      %v1103 = vmul.f32 %v1065, %v1097
      %v1104 = vmul.f32 %v1066, %v1097
      %v1105 = vmul.f32 %v1067, %v1097
      %v1106 = vmul.f32 %v1068, %v1097
      %v1107 = vmul.f32 %v1069, %v1097
      %v1108 = vmul.f32 %v1070, %v1097
      %v1109 = vmul.f32 %v1071, %v1097
      %v1110 = vmul.f32 %v1072, %v1097
      %v1111 = vmul.f32 %v1073, %v1097
      %v1112 = vmul.f32 %v1074, %v1097
      %v1113 = vmul.f32 %v1075, %v1097
      %v1114 = vmul.f32 %v1076, %v1097
      %v1115 = vmul.f32 %v1077, %v1097
      %v1116 = vmul.f32 %v1078, %v1097
      %v1117 = vmul.f32 %v1079, %v1097
      %v1118 = vmul.f32 %v1080, %v1097
      %v1119 = vmul.f32 %v1081, %v1097
      %v1120 = vmul.f32 %v1082, %v1097
      %v1121 = vmul.f32 %v1083, %v1097
      %v1122 = vmul.f32 %v1084, %v1097
      %v1123 = vmul.f32 %v1085, %v1097
      %v1124 = vmul.f32 %v1086, %v1097
      %v1125 = vmul.f32 %v1087, %v1097
      %v1126 = vmul.f32 %v1088, %v1097
      %v1127 = vmul.f32 %v1089, %v1097
      %v1128 = vmul.f32 %v1090, %v1097
      %v1129 = vmul.f32 %v1091, %v1097
      %v1130 = vmul.f32 %v1092, %v1097
      %1131 = vadd.xlane.f32.xlu0 %v1099
      %v1132 = vpop.xlane.xlu0 %1131
      %1133 = vadd.xlane.f32.xlu0 %v1100
      %v1134 = vpop.xlane.xlu0 %1133
      %1135 = vadd.xlane.f32.xlu0 %v1101
      %v1136 = vpop.xlane.xlu0 %1135
      %1137 = vadd.xlane.f32.xlu0 %v1102
      %v1138 = vpop.xlane.xlu0 %1137
      %1139 = vadd.xlane.f32.xlu0 %v1103
      %v1140 = vpop.xlane.xlu0 %1139
      %1141 = vadd.xlane.f32.xlu0 %v1104
      %v1142 = vpop.xlane.xlu0 %1141
      %1143 = vadd.xlane.f32.xlu0 %v1105
      %v1144 = vpop.xlane.xlu0 %1143
      %1145 = vadd.xlane.f32.xlu0 %v1106
      %v1146 = vpop.xlane.xlu0 %1145
      %1147 = vadd.xlane.f32.xlu0 %v1107
      %v1148 = vpop.xlane.xlu0 %1147
      %1149 = vadd.xlane.f32.xlu0 %v1108
      %v1150 = vpop.xlane.xlu0 %1149
      %1151 = vadd.xlane.f32.xlu0 %v1109
      %v1152 = vpop.xlane.xlu0 %1151
      %1153 = vadd.xlane.f32.xlu0 %v1110
      %v1154 = vpop.xlane.xlu0 %1153
      %1155 = vadd.xlane.f32.xlu0 %v1111
      %v1156 = vpop.xlane.xlu0 %1155
      %1157 = vadd.xlane.f32.xlu0 %v1112
      %v1158 = vpop.xlane.xlu0 %1157
      %1159 = vadd.xlane.f32.xlu0 %v1113
      %v1160 = vpop.xlane.xlu0 %1159
      %1161 = vadd.xlane.f32.xlu0 %v1114
      %v1162 = vpop.xlane.xlu0 %1161
      %1163 = vadd.xlane.f32.xlu0 %v1115
      %v1164 = vpop.xlane.xlu0 %1163
      %1165 = vadd.xlane.f32.xlu0 %v1116
      %v1166 = vpop.xlane.xlu0 %1165
      %1167 = vadd.xlane.f32.xlu0 %v1117
      %v1168 = vpop.xlane.xlu0 %1167
      %1169 = vadd.xlane.f32.xlu0 %v1118
      %v1170 = vpop.xlane.xlu0 %1169
      %1171 = vadd.xlane.f32.xlu0 %v1119
      %v1172 = vpop.xlane.xlu0 %1171
      %1173 = vadd.xlane.f32.xlu0 %v1120
      %v1174 = vpop.xlane.xlu0 %1173
      %1175 = vadd.xlane.f32.xlu0 %v1121
      %v1176 = vpop.xlane.xlu0 %1175
      %1177 = vadd.xlane.f32.xlu0 %v1122
      %v1178 = vpop.xlane.xlu0 %1177
      %1179 = vadd.xlane.f32.xlu0 %v1123
      %v1180 = vpop.xlane.xlu0 %1179
      %1181 = vadd.xlane.f32.xlu0 %v1124
      %v1182 = vpop.xlane.xlu0 %1181
      %1183 = vadd.xlane.f32.xlu0 %v1125
      %v1184 = vpop.xlane.xlu0 %1183
      %1185 = vadd.xlane.f32.xlu0 %v1126
      %v1186 = vpop.xlane.xlu0 %1185
      %1187 = vadd.xlane.f32.xlu0 %v1127
      %v1188 = vpop.xlane.xlu0 %1187
      %1189 = vadd.xlane.f32.xlu0 %v1128
      %v1190 = vpop.xlane.xlu0 %1189
      %1191 = vadd.xlane.f32.xlu0 %v1129
      %v1192 = vpop.xlane.xlu0 %1191
      %1193 = vadd.xlane.f32.xlu0 %v1130
      %v1194 = vpop.xlane.xlu0 %1193
      %v1196 = vlaneseq
      %v1197 = vshrl.u32 %v1196, 7
      %v1198 = vsub.s32 0, %v1197
      %v1199 = vrot.slane %v339, %v1198
      %v1201 = vadd.f32 %v1132, %v1199
      %v1202 = vadd.f32 %v1134, %v1199
      %v1203 = vadd.f32 %v1136, %v1199
      %v1204 = vadd.f32 %v1138, %v1199
      %v1205 = vadd.f32 %v1140, %v1199
      %v1206 = vadd.f32 %v1142, %v1199
      %v1207 = vadd.f32 %v1144, %v1199
      %v1208 = vadd.f32 %v1146, %v1199
      %v1209 = vadd.f32 %v1148, %v1199
      %v1210 = vadd.f32 %v1150, %v1199
      %v1211 = vadd.f32 %v1152, %v1199
      %v1212 = vadd.f32 %v1154, %v1199
      %v1213 = vadd.f32 %v1156, %v1199
      %v1214 = vadd.f32 %v1158, %v1199
      %v1215 = vadd.f32 %v1160, %v1199
      %v1216 = vadd.f32 %v1162, %v1199
      %v1217 = vadd.f32 %v1164, %v1199
      %v1218 = vadd.f32 %v1166, %v1199
      %v1219 = vadd.f32 %v1168, %v1199
      %v1220 = vadd.f32 %v1170, %v1199
      %v1221 = vadd.f32 %v1172, %v1199
      %v1222 = vadd.f32 %v1174, %v1199
      %v1223 = vadd.f32 %v1176, %v1199
      %v1224 = vadd.f32 %v1178, %v1199
      %v1225 = vadd.f32 %v1180, %v1199
      %v1226 = vadd.f32 %v1182, %v1199
      %v1227 = vadd.f32 %v1184, %v1199
      %v1228 = vadd.f32 %v1186, %v1199
      %v1229 = vadd.f32 %v1188, %v1199
      %v1230 = vadd.f32 %v1190, %v1199
      %v1231 = vadd.f32 %v1192, %v1199
      %v1232 = vadd.f32 %v1194, %v1199
      %vm1233 = vcmask 7168
      %1234 = vst.msk [vmem:[%s285] sm:$0xff] %vm1233, %v1201
      %1235 = vst.msk [vmem:[%s285 + $0x8] sm:$0xff] %vm1233, %v1202
      %1236 = vst.msk [vmem:[%s285 + $0x10] sm:$0xff] %vm1233, %v1203
      %1237 = vst.msk [vmem:[%s285 + $0x18] sm:$0xff] %vm1233, %v1204
      %1238 = vst.msk [vmem:[%s285 + $0x20] sm:$0xff] %vm1233, %v1205
      %1239 = vst.msk [vmem:[%s285 + $0x28] sm:$0xff] %vm1233, %v1206
      %1240 = vst.msk [vmem:[%s285 + $0x30] sm:$0xff] %vm1233, %v1207
      %1241 = vst.msk [vmem:[%s285 + $0x38] sm:$0xff] %vm1233, %v1208
      %1242 = vst.msk [vmem:[%s285 + $0x40] sm:$0xff] %vm1233, %v1209
      %1243 = vst.msk [vmem:[%s285 + $0x48] sm:$0xff] %vm1233, %v1210
      %1244 = vst.msk [vmem:[%s285 + $0x50] sm:$0xff] %vm1233, %v1211
      %1245 = vst.msk [vmem:[%s285 + $0x58] sm:$0xff] %vm1233, %v1212
      %1246 = vst.msk [vmem:[%s285 + $0x60] sm:$0xff] %vm1233, %v1213
      %1247 = vst.msk [vmem:[%s285 + $0x68] sm:$0xff] %vm1233, %v1214
      %1248 = vst.msk [vmem:[%s285 + $0x70] sm:$0xff] %vm1233, %v1215
      %1249 = vst.msk [vmem:[%s285 + $0x78] sm:$0xff] %vm1233, %v1216
      %1250 = vst.msk [vmem:[%s285 + $0x80] sm:$0xff] %vm1233, %v1217
      %1251 = vst.msk [vmem:[%s285 + $0x88] sm:$0xff] %vm1233, %v1218
      %1252 = vst.msk [vmem:[%s285 + $0x90] sm:$0xff] %vm1233, %v1219
      %1253 = vst.msk [vmem:[%s285 + $0x98] sm:$0xff] %vm1233, %v1220
      %1254 = vst.msk [vmem:[%s285 + $0xa0] sm:$0xff] %vm1233, %v1221
      %1255 = vst.msk [vmem:[%s285 + $0xa8] sm:$0xff] %vm1233, %v1222
      %1256 = vst.msk [vmem:[%s285 + $0xb0] sm:$0xff] %vm1233, %v1223
      %1257 = vst.msk [vmem:[%s285 + $0xb8] sm:$0xff] %vm1233, %v1224
      %1258 = vst.msk [vmem:[%s285 + $0xc0] sm:$0xff] %vm1233, %v1225
      %1259 = vst.msk [vmem:[%s285 + $0xc8] sm:$0xff] %vm1233, %v1226
      %1260 = vst.msk [vmem:[%s285 + $0xd0] sm:$0xff] %vm1233, %v1227
      %1261 = vst.msk [vmem:[%s285 + $0xd8] sm:$0xff] %vm1233, %v1228
      %1262 = vst.msk [vmem:[%s285 + $0xe0] sm:$0xff] %vm1233, %v1229
      %1263 = vst.msk [vmem:[%s285 + $0xe8] sm:$0xff] %vm1233, %v1230
      %1264 = vst.msk [vmem:[%s285 + $0xf0] sm:$0xff] %vm1233, %v1231
      %1265 = vst.msk [vmem:[%s285 + $0xf8] sm:$0xff] %vm1233, %v1232
      %s1266 = smul.u32 32, %s20
      %p1267 = scmp.lt.s32.totalorder %s1266, 63
      %s1268 = scalar_select %p1267, %s1266, 63
      %s1269 = smul.addr %s1268, 8
      %s1270 = scalar_lea.vmem %s7, %s1269
      // Predicated region
      $region49: #{mlp_forward.1} parent=47 // pred_check
        %p1271 = pneg %p190
      $region50: #{mlp_forward.1} parent=47 // pred_check_branch
        %1273 = sbr.rel (%p1271) target = $region52
      $region51: #{mlp_forward.1} parent=47 // pred_region
        %s1274 = smul.u32 32, %s20
      $region52: #{mlp_forward.1} parent=47 // pred_fallthru
        _
    $region48: #{mlp_forward.1} parent=5 // pred_fallthru
      _
    %p1275 = scmp.le.s32.totalorder 2, %s15
    // Predicated region
    $region53: #{mlp_forward.1} parent=5 // pred_check
      %p1276 = pneg %p1275
    $region54: #{mlp_forward.1} parent=5 // pred_check_branch
      %1278 = sbr.rel (%p1276) target = $region56
    $region55: #{mlp_forward.1} parent=5 // pred_region
      %s1279 = ssub.s32 %s15, 2
      // Predicated region
      $region57: #{mlp_forward.1} parent=55 // pred_check
        %p1280 = pneg %p196
      $region58: #{mlp_forward.1} parent=55 // pred_check_branch
        %1282 = sbr.rel (%p1280) target = $region60
      $region59: #{mlp_forward.1} parent=55 // pred_region
        %s1283 = smul.u32 32, %s21
        %p1284 = scmp.lt.s32.totalorder %s1283, 63
        %s1285 = scalar_select %p1284, %s1283, 63
        %s1286 = smul.addr %s1285, 8
        %s1287 = scalar_lea.vmem %s7, %s1286
      $region60: #{mlp_forward.1} parent=55 // pred_fallthru
        _
    $region56: #{mlp_forward.1} parent=5 // pred_fallthru
      _
  $region6: #{mlp_forward.1} parent=0 // loop_footer
    %s19 = sadd.s32 1, %s15
  $region7: #{mlp_forward.1} parent=0 // loop_footer_branch
    %14 = sbr.rel target = $region3
  $region8: #{mlp_forward.1} parent=0 // loop_exit
    _

</llo_original>
